<compile_context>
chip_gen: v7x
topology: tpu7x:2x2x1
jax: 0.10.0
libtpu: 0.0.40
codegen_flags: <defaults>
</compile_context>

<pallas_src>
import jax
import jax.numpy as jnp
from jax.experimental import pallas as pl
from jax.experimental.pallas import tpu as pltpu

OUT_FEATURES = 5
N_PAD = 8                 # padded class dim (full-dim block, 16x fewer bytes than 128)
MAX_TILE_B = 2048         # upper bound on the batch tile
VMEM_BUDGET = 40 << 20    # conservative double-buffered budget (fits v7x's 64 MiB too)


def _round_up(x, m):
    return (x + m - 1) // m * m


# ----------------------------------------------------------------------------
# in-kernel helpers
# ----------------------------------------------------------------------------
def _tile_forward(x_ref, wt_ref, b_ref):
    # y_pred = sigmoid(x @ W^T + b); W^T is pre-transposed & zero-padded (K, N_PAD)
    logits = jnp.dot(x_ref[...], wt_ref[...], preferred_element_type=jnp.float32)
    return jax.nn.sigmoid(logits + b_ref[...])            # (tile_b, N_PAD) f32


def _tile_nll_sum(y_pred, y_ref, tile_start, true_b):
    tile_b, n_pad = y_pred.shape
    cls = jax.lax.broadcasted_iota(jnp.int32, (tile_b, n_pad), 1)
    cls_mask = cls < OUT_FEATURES
    # NOTE: no max-subtraction is needed ONLY because these "logits" are sigmoid
    # outputs bounded in (0, 1); do not reuse this on unbounded logits.
    exp_vals = jnp.where(cls_mask, jnp.exp(y_pred), 0.0)
    lse = jnp.log(jnp.sum(exp_vals, axis=-1, keepdims=True))      # (tile_b, 1)
    onehot = (cls == y_ref[...]).astype(jnp.float32)              # labels in [0, 5)
    picked = jnp.sum(onehot * y_pred, axis=-1, keepdims=True)     # (tile_b, 1)
    nll = lse - picked
    row = jax.lax.broadcasted_iota(jnp.int32, (tile_b, 1), 0)
    valid = (tile_start + row) < true_b                           # mask batch padding
    return jnp.sum(jnp.where(valid, nll, 0.0))                    # scalar f32


def _write_partial(part_ref, value):
    # Each grid step owns its own (1, 8, 128) partial block -> axis stays "parallel".
    r = jax.lax.broadcasted_iota(jnp.int32, part_ref.shape, 1)
    c = jax.lax.broadcasted_iota(jnp.int32, part_ref.shape, 2)
    part_ref[...] = jnp.where((r == 0) & (c == 0), value, 0.0)


# ----------------------------------------------------------------------------
# kernels
# ----------------------------------------------------------------------------
def _forward_kernel(x_ref, wt_ref, b_ref, o_ref):
    o_ref[...] = _tile_forward(x_ref, wt_ref, b_ref).astype(o_ref.dtype)


def _loss_kernel(nb_ref, x_ref, wt_ref, b_ref, y_ref, part_ref):
    # loss-only fused kernel: NO y_pred writeback (dominant HBM stream removed)
    i = pl.program_id(0)
    tile_b = x_ref.shape[0]
    y_pred = _tile_forward(x_ref, wt_ref, b_ref)
    _write_partial(part_ref, _tile_nll_sum(y_pred, y_ref, i * tile_b, nb_ref[0]))


def _loss_pred_kernel(nb_ref, x_ref, wt_ref, b_ref, y_ref, yp_ref, part_ref):
    i = pl.program_id(0)
    tile_b = x_ref.shape[0]
    y_pred = _tile_forward(x_ref, wt_ref, b_ref)
    yp_ref[...] = y_pred.astype(yp_ref.dtype)              # 8-wide, not 128-wide
    _write_partial(part_ref, _tile_nll_sum(y_pred, y_ref, i * tile_b, nb_ref[0]))


# ----------------------------------------------------------------------------
# wrapper-side helpers
# ----------------------------------------------------------------------------
def _prep_inputs(x, w, b):
    """Keep bf16 x as bf16; transpose + zero-pad W once; bias stays f32."""
    if x.dtype != jnp.bfloat16 and x.dtype != jnp.float32:
        x = x.astype(jnp.float32)
    k = x.shape[1]
    wt = jnp.zeros((k, N_PAD), x.dtype).at[:, :OUT_FEATURES].set(w.T.astype(x.dtype))
    bp = jnp.zeros((1, N_PAD), jnp.float32).at[:, :OUT_FEATURES].set(
        b.astype(jnp.float32).reshape(1, OUT_FEATURES))
    return x, wt, bp


def _select_tiling(B, K, x_bytes, tile_b=None):
    b_pad8 = _round_up(max(B, 1), 8)
    if tile_b is None:
        per_row = 2 * K * x_bytes + 2 * N_PAD * 4          # dbl-buffered x tile + out tile
        cap = (VMEM_BUDGET // max(per_row, 1)) // 8 * 8
        tile_b = max(8, min(MAX_TILE_B, cap, b_pad8))
    else:
        tile_b = max(8, min(_round_up(tile_b, 8), b_pad8))
    # Prefer a tile dividing round_up(B, 8): avoids a full wrapper-side pad copy of x.
    t = tile_b
    while t >= max(8, tile_b - 256) and b_pad8 % t:
        t -= 8
    if t >= 8 and b_pad8 % t == 0:
        return t, b_pad8
    return tile_b, _round_up(B, tile_b)


def _vmem_limit(tile_b, K, x_bytes):
    need = (2 * tile_b * K * x_bytes          # double-buffered x tiles
            + 2 * tile_b * N_PAD * 4          # double-buffered output tiles
            + K * N_PAD * x_bytes             # resident W^T
            + 4 * N_PAD * 4                   # bias
            + 2 * 8 * 128 * 4                 # partial-sum tiles
            + (2 << 20))                      # headroom
    return int(min(max(2 * need, 32 << 20), 48 << 20))


def _pad_rows(a, rows):
    if a.shape[0] != rows:
        a = jnp.pad(a, ((0, rows - a.shape[0]),) + ((0, 0),) * (a.ndim - 1))
    return a


# ----------------------------------------------------------------------------
# public API
# ----------------------------------------------------------------------------
def torch_model_forward(x, w, b, *, tile_b=None):
    """y_pred = sigmoid(x @ W^T + b), shape (B, 5)."""
    B, K = x.shape
    x, wt, bp = _prep_inputs(x, w, b)
    tile_b, b_pad = _select_tiling(B, K, x.dtype.itemsize, tile_b)
    xp = _pad_rows(x, b_pad)
    grid = (b_pad // tile_b,)

    out = pl.pallas_call(
        _forward_kernel,
        out_shape=jax.ShapeDtypeStruct((b_pad, N_PAD), x.dtype),
        grid_spec=pltpu.PrefetchScalarGridSpec(
            num_scalar_prefetch=0,
            grid=grid,
            in_specs=[
                pl.BlockSpec((tile_b, K), lambda i: (i, 0)),      # x tile
                pl.BlockSpec((K, N_PAD), lambda i: (0, 0)),       # W^T (resident)
                pl.BlockSpec((1, N_PAD), lambda i: (0, 0)),       # bias (resident)
            ],
            out_specs=pl.BlockSpec((tile_b, N_PAD), lambda i: (i, 0)),
        ),
        compiler_params=pltpu.CompilerParams(
            dimension_semantics=("parallel",),
            vmem_limit_bytes=_vmem_limit(tile_b, K, x.dtype.itemsize)),
    )(xp, wt, bp)
    return out[:B, :OUT_FEATURES]


def torch_model_loss(x, w, b, y, *, tile_b=None, return_y_pred=False):
    """Scalar CrossEntropyLoss(sigmoid(x @ W^T + b), y); fused forward + loss."""
    B, K = x.shape
    x, wt, bp = _prep_inputs(x, w, b)
    tile_b, b_pad = _select_tiling(B, K, x.dtype.itemsize, tile_b)
    xp = _pad_rows(x, b_pad)
    y2 = _pad_rows(y.astype(jnp.int32).reshape(-1, 1), b_pad)
    grid_n = b_pad // tile_b
    nb = jnp.asarray([B], jnp.int32)                       # scalar-prefetch (no retrace)

    part_shape = jax.ShapeDtypeStruct((grid_n, 8, 128), jnp.float32)
    part_spec = pl.BlockSpec((1, 8, 128), lambda i, nb: (i, 0, 0))
    if return_y_pred:
        kernel = _loss_pred_kernel
        out_shape = (jax.ShapeDtypeStruct((b_pad, N_PAD), x.dtype), part_shape)
        out_specs = (pl.BlockSpec((tile_b, N_PAD), lambda i, nb: (i, 0)), part_spec)
    else:
        kernel = _loss_kernel                              # loss-only: no y_pred stream
        out_shape = part_shape
        out_specs = part_spec

    outs = pl.pallas_call(
        kernel,
        out_shape=out_shape,
        grid_spec=pltpu.PrefetchScalarGridSpec(
            num_scalar_prefetch=1,
            grid=(grid_n,),
            in_specs=[
                pl.BlockSpec((tile_b, K), lambda i, nb: (i, 0)),   # x tile
                pl.BlockSpec((K, N_PAD), lambda i, nb: (0, 0)),    # W^T (resident)
                pl.BlockSpec((1, N_PAD), lambda i, nb: (0, 0)),    # bias (resident)
                pl.BlockSpec((tile_b, 1), lambda i, nb: (i, 0)),   # labels tile
            ],
            out_specs=out_specs,
        ),
        compiler_params=pltpu.CompilerParams(
            dimension_semantics=("parallel",),              # per-tile partials -> parallel
            vmem_limit_bytes=_vmem_limit(tile_b, K, x.dtype.itemsize)),
    )(nb, xp, wt, bp, y2)

    if return_y_pred:
        y_pred_pad, partials = outs
        loss = jnp.sum(partials) / B                        # reduction='mean'
        return loss, y_pred_pad[:B, :OUT_FEATURES]
    return jnp.sum(outs) / B


def torch_model_apply(x, w, b, y=None, *, tile_b=None):
    """Mirrors TorchModel.forward: returns loss if y is given, else y_pred."""
    if y is None:
        return torch_model_forward(x, w, b, tile_b=tile_b)
    return torch_model_loss(x, w, b, y, tile_b=tile_b)


# ----------------------------------------------------------------------------
# demo / self-test
# ----------------------------------------------------------------------------
if __name__ == "__main__":
    key = jax.random.PRNGKey(0)
    k_x, k_w, k_b, k_y = jax.random.split(key, 4)

    batch = 20          # deliberately NOT a multiple of 8*tile to exercise masking
    input_size = 32

    # deterministic synthetic parameters (nn.Linear-style uniform init)
    bound = 1.0 / (input_size ** 0.5)
    w = jax.random.uniform(k_w, (OUT_FEATURES, input_size),
                           dtype=jnp.float32, minval=-bound, maxval=bound)
    b = jax.random.uniform(k_b, (OUT_FEATURES,),
                           dtype=jnp.float32, minval=-bound, maxval=bound)

    x = jax.random.normal(k_x, (batch, input_size), dtype=jnp.float32)
    y = jax.random.randint(k_y, (batch,), 0, OUT_FEATURES, dtype=jnp.int32)

    # pure-JAX reference
    ref_pred = jax.nn.sigmoid(x @ w.T + b)
    ref_logp = jax.nn.log_softmax(ref_pred, axis=-1)
    ref_loss = -jnp.mean(ref_logp[jnp.arange(batch), y])

    # inference path (auto tile -> single grid step)
    y_pred = torch_model_apply(x, w, b)
    jax.block_until_ready(y_pred)
    assert jnp.allclose(y_pred, ref_pred, atol=1e-5, rtol=1e-5)

    # training path, loss-only (small explicit tile -> multi-step grid + row masking)
    loss = torch_model_apply(x, w, b, y, tile_b=8)
    jax.block_until_ready(loss)
    assert jnp.allclose(loss, ref_loss, atol=1e-5, rtol=1e-5)

    # training path returning y_pred as well (fused variant)
    loss2, y_pred2 = torch_model_loss(x, w, b, y, tile_b=8, return_y_pred=True)
    jax.block_until_ready(loss2)
    assert jnp.allclose(loss2, ref_loss, atol=1e-5, rtol=1e-5)
    assert jnp.allclose(y_pred2, ref_pred, atol=1e-5, rtol=1e-5)

    print("KERNEL_OK")
</pallas_src>

<mosaic_0001>
module attributes {stable_mosaic.version = 11 : i64} {
  func.func @_forward_kernel(%arg0: i32, %arg1: memref<24x32xf32, #tpu.memory_space<vmem>>, %arg2: memref<32x8xf32, #tpu.memory_space<vmem>>, %arg3: memref<1x8xf32, #tpu.memory_space<vmem>>, %arg4: memref<24x8xf32, #tpu.memory_space<vmem>>) attributes {dimension_semantics = [#tpu.dimension_semantics<parallel>], iteration_bounds = array<i64: 1>, scalar_prefetch = 0 : i64, scratch_operands = 0 : i64, tpu.core_type = #tpu.core_type<tc>, window_params = [{transform_indices = @transform_0, window_bounds = array<i64: 24, 32>}, {pipeline_mode = #tpu.pipeline_mode<synchronous>, transform_indices = @transform_1, window_bounds = array<i64: 32, 8>}, {pipeline_mode = #tpu.pipeline_mode<synchronous>, transform_indices = @transform_2, window_bounds = array<i64: 1, 8>}, {transform_indices = @transform_3, window_bounds = array<i64: 24, 8>}]} {
    %c0 = arith.constant 0 : index
    %c0_0 = arith.constant 0 : index
    %0 = vector.load %arg1[%c0, %c0_0] : memref<24x32xf32, #tpu.memory_space<vmem>>, vector<24x32xf32>
    %c0_1 = arith.constant 0 : index
    %c0_2 = arith.constant 0 : index
    %1 = vector.load %arg2[%c0_1, %c0_2] : memref<32x8xf32, #tpu.memory_space<vmem>>, vector<32x8xf32>
    %cst = arith.constant dense<0.000000e+00> : vector<24x8xf32>
    %2 = tpu.matmul %0, %1, %cst {dimension_numbers = #tpu.dot_dimension_numbers<[1], [0], [0], [1], [0, 0, 1, 1], [], []>} : vector<24x32xf32>, vector<32x8xf32>, vector<24x8xf32> -> vector<24x8xf32>
    %c0_3 = arith.constant 0 : index
    %c0_4 = arith.constant 0 : index
    %3 = vector.load %arg3[%c0_3, %c0_4] : memref<1x8xf32, #tpu.memory_space<vmem>>, vector<1x8xf32>
    %4 = vector.broadcast %3 : vector<1x8xf32> to vector<24x8xf32>
    %5 = arith.addf %2, %4 : vector<24x8xf32>
    %6 = arith.negf %5 : vector<24x8xf32>
    %7 = math.exp %6 : vector<24x8xf32>
    %cst_5 = arith.constant 1.000000e+00 : f32
    %8 = vector.broadcast %cst_5 : f32 to vector<24x8xf32>
    %9 = arith.addf %8, %7 : vector<24x8xf32>
    %10 = arith.divf %8, %9 : vector<24x8xf32>
    %c0_6 = arith.constant 0 : index
    %c0_7 = arith.constant 0 : index
    %11 = vector.load %arg4[%c0_6, %c0_7] : memref<24x8xf32, #tpu.memory_space<vmem>>, vector<24x8xf32>
    tpu.vector_store %arg4[%c0_6, %c0_7], %10 {strides = array<i32>} : memref<24x8xf32, #tpu.memory_space<vmem>>, vector<24x8xf32>,
    return
  }
  func.func @transform_0(%arg0: i32) -> (i32, i32) {
    %c0_i32 = arith.constant 0 : i32
    %c0_i32_0 = arith.constant 0 : i32
    return %arg0, %c0_i32 : i32, i32
  }
  func.func @transform_1(%arg0: i32) -> (i32, i32) {
    %c0_i32 = arith.constant 0 : i32
    %c0_i32_0 = arith.constant 0 : i32
    %c0_i32_1 = arith.constant 0 : i32
    return %c0_i32, %c0_i32_0 : i32, i32
  }
  func.func @transform_2(%arg0: i32) -> (i32, i32) {
    %c0_i32 = arith.constant 0 : i32
    %c0_i32_0 = arith.constant 0 : i32
    %c0_i32_1 = arith.constant 0 : i32
    return %c0_i32, %c0_i32_0 : i32, i32
  }
  func.func @transform_3(%arg0: i32) -> (i32, i32) {
    %c0_i32 = arith.constant 0 : i32
    %c0_i32_0 = arith.constant 0 : i32
    return %arg0, %c0_i32 : i32, i32
  }
}

</mosaic_0001>

<llo_original>
// kernel: tpu_custom_call.1
$region0: #{tpu_custom_call.1}
  #allocation0 [shape = 'u32[]', space=smem, size = 0x4, offset = 0x4, fixed_abs, tag = 'smem constant byte address 0x4 - core index']
  #allocation1 [shape = 'u32[144,128]{1,0:T(1,128)}', space=vmem, size = 0x12000, scoped, tag = 'internal scratch']
  %s0 = inlined_call_operand.vmem [shape: f32[24,32], index: 0, kind: input, shape index: {}]
  %s1 = inlined_call_operand.vmem [shape: f32[32,8], index: 1, kind: input, shape index: {}]
  %s2 = inlined_call_operand.vmem [shape: f32[1,8], index: 2, kind: input, shape index: {}]
  %s3 = inlined_call_operand.vmem [shape: f32[24,8], index: 3, kind: output, shape index: {}]
  %s4 = sld [smem:[#allocation0]]
  $region22: #{tpu_custom_call.1} parent=0
    _
  %s6 = ssub.s32 1, %s4
  %s7 = scalar_select 0, %s6, %s4
  // Predicated region
  $region2: #{tpu_custom_call.1} parent=0 // pred_check
    _
  $region3: #{tpu_custom_call.1} parent=0 // pred_check_branch
    %9 = sbr.rel (0) target = $region5
  $region4: #{tpu_custom_call.1} parent=0 // pred_region
    _
  $region5: #{tpu_custom_call.1} parent=0 // pred_fallthru
    _
  // Predicated region
  $region6: #{tpu_custom_call.1} parent=0 // pred_check
    _
  $region7: #{tpu_custom_call.1} parent=0 // pred_check_branch
    %11 = sbr.rel (0) target = $region9
  $region8: #{tpu_custom_call.1} parent=0 // pred_region
    _
  $region9: #{tpu_custom_call.1} parent=0 // pred_fallthru
    _
  // Predicated region
  $region10: #{tpu_custom_call.1} parent=0 // pred_check
    _
  $region11: #{tpu_custom_call.1} parent=0 // pred_check_branch
    %13 = sbr.rel (0) target = $region13
  $region12: #{tpu_custom_call.1} parent=0 // pred_region
    _
  $region13: #{tpu_custom_call.1} parent=0 // pred_fallthru
    _
  %v14 = vld [vmem:[%s0] sm:$0xff]
  %v15 = vld [vmem:[%s0 + $0x8] sm:$0xff]
  %v16 = vld [vmem:[%s0 + $0x10] sm:$0xff]
  %v17 = vld [vmem:[%s1] sm:$0xff]
  %v18 = vld [vmem:[%s1 + $0x8] sm:$0xff]
  %v19 = vld [vmem:[%s1 + $0x10] sm:$0xff]
  %v20 = vld [vmem:[%s1 + $0x18] sm:$0xff]
  %v21 = vld [vmem:[%s2] sm:$0x1]
  %v23 = vlaneseq
  %v24 = vshrl.u32 %v23, 7
  %v25 = vsub.s32 0, %v24
  %v26 = vrot.slane %v21, %v25
  %vm28 = vcmask 261120
  %v30 = vsel %vm28, %v14, 0
  %v33 = vsel %vm28, %v15, 0
  %v36 = vsel %vm28, %v16, 0
  %38 = vmatprep.subr.mxu0 0.0
  %39 = vmatpush1.msra.mxu0 %v17
  %40 = vmatprep.subr.mxu0 0.0
  %41 = vmatpush1.msra.mxu0 %v18
  %42 = vmatprep.subr.mxu0 0.0
  %43 = vmatpush1.msra.mxu0 %v19
  %44 = vmatprep.subr.mxu0 0.0
  %45 = vmatpush1.msra.mxu0 %v20
  %46 = vmatprep.subr.mxu0 0.0
  %47 = vmatpush1.msra.mxu0 0.0
  %48 = vmatprep.subr.mxu0 0.0
  %49 = vmatpush1.msra.mxu0 0.0
  %50 = vmatprep.subr.mxu0 0.0
  %51 = vmatpush1.msra.mxu0 0.0
  %52 = vmatprep.subr.mxu0 0.0
  %53 = vmatpush1.msra.mxu0 0.0
  %54 = vmatprep.subr.mxu0 0.0
  %55 = vmatpush1.msra.mxu0 0.0
  %56 = vmatprep.subr.mxu0 0.0
  %57 = vmatpush1.msra.mxu0 0.0
  %58 = vmatprep.subr.mxu0 0.0
  %59 = vmatpush1.msra.mxu0 0.0
  %60 = vmatprep.subr.mxu0 0.0
  %61 = vmatpush1.msra.mxu0 0.0
  %62 = vmatprep.subr.mxu0 0.0
  %63 = vmatpush1.msra.mxu0 0.0
  %64 = vmatprep.subr.mxu0 0.0
  %65 = vmatpush1.msra.mxu0 0.0
  %66 = vmatprep.subr.mxu0 0.0
  %67 = vmatpush1.msra.mxu0 0.0
  %68 = vmatprep.subr.mxu0 0.0
  %69 = vmatpush1.msra.mxu0 0.0
  %70 = vmatprep.subr.mxu0 0.0
  %71 = vmatpush1.msra.mxu0 0.0
  %72 = vmatprep.subr.mxu0 0.0
  %73 = vmatpush1.msra.mxu0 0.0
  %74 = vmatprep.subr.mxu0 0.0
  %75 = vmatpush1.msra.mxu0 0.0
  %76 = vmatprep.subr.mxu0 0.0
  %77 = vmatpush1.msra.mxu0 0.0
  %78 = vmatprep.subr.mxu0 0.0
  %79 = vmatpush1.msra.mxu0 0.0
  %80 = vmatprep.subr.mxu0 0.0
  %81 = vmatpush1.msra.mxu0 0.0
  %82 = vmatprep.subr.mxu0 0.0
  %83 = vmatpush1.msra.mxu0 0.0
  %84 = vmatprep.subr.mxu0 0.0
  %85 = vmatpush1.msra.mxu0 0.0
  %86 = vmatprep.subr.mxu0 0.0
  %87 = vmatpush1.msra.mxu0 0.0
  %88 = vmatprep.subr.mxu0 0.0
  %89 = vmatpush1.msra.mxu0 0.0
  %90 = vmatprep.subr.mxu0 0.0
  %91 = vmatpush1.msra.mxu0 0.0
  %92 = vmatprep.subr.mxu0 0.0
  %93 = vmatpush1.msra.mxu0 0.0
  %94 = vmatprep.subr.mxu0 0.0
  %95 = vmatpush1.msra.mxu0 0.0
  %96 = vmatprep.subr.mxu0 0.0
  %97 = vmatpush1.msra.mxu0 0.0
  %98 = vmatprep.subr.mxu0 0.0
  %99 = vmatpush1.msra.mxu0 0.0
  %100 = vmatprep.subr.mxu0 0.0
  %101 = vmatpush1.msra.mxu0 0.0
  %102 = vmatprep.mubr.f32.mxu0 0.0
  %103 = vmatmul.mubr.f32.gmra.mrb[0].mxu0 %v30
  %v104 = vpop.f32.mrb[0].mxu0
  %v105 = vadd.f32 %v26, %v104
  %v106 = vpop.f32.mrb[0].mxu0
  %107 = vmatprep.mubr.f32.mxu0 0.0
  %108 = vmatmul.mubr.f32.gmra.mrb[0].mxu0 %v33
  %v109 = vpop.f32.mrb[0].mxu0
  %v110 = vadd.f32 %v26, %v109
  %v111 = vpop.f32.mrb[0].mxu0
  %112 = vmatprep.mubr.f32.mxu0 0.0
  %113 = vmatmul.mubr.f32.gmra.mrb[0].mxu0 %v36
  %v114 = vpop.f32.mrb[0].mxu0
  %v115 = vadd.f32 %v26, %v114
  %v116 = vpop.f32.mrb[0].mxu0
  %117 = vdwg.mxu0
  %v118 = vxor.u32 %v105, 2147483648
  %v119 = vxor.u32 %v110, 2147483648
  %v120 = vxor.u32 %v115, 2147483648
  %v121 = vmul.f32 %v118, 1.442695
  %v122 = vpow.pop %v121
  %v123 = vmul.f32 %v119, 1.442695
  %v124 = vpow.pop %v123
  %v125 = vmul.f32 %v120, 1.442695
  %v126 = vpow.pop %v125
  %v127 = vadd.f32 %v122, 1.0
  %v128 = vadd.f32 %v124, 1.0
  %v129 = vadd.f32 %v126, 1.0
  %v130 = vrcp.pop %v127
  %v131 = vmul.f32 1.0, %v130
  %v132 = vrcp.pop %v128
  %v133 = vmul.f32 1.0, %v132
  %v134 = vrcp.pop %v129
  %v135 = vmul.f32 1.0, %v134
  %vm136 = vcmask 64512
  %137 = vst.msk [vmem:[%s3] sm:$0xff] %vm136, %v131
  %138 = vst.msk [vmem:[%s3 + $0x8] sm:$0xff] %vm136, %v133
  %139 = vst.msk [vmem:[%s3 + $0x10] sm:$0xff] %vm136, %v135
  // Predicated region
  $region14: #{tpu_custom_call.1} parent=0 // pred_check
    _
  $region15: #{tpu_custom_call.1} parent=0 // pred_check_branch
    %141 = sbr.rel (0) target = $region17
  $region16: #{tpu_custom_call.1} parent=0 // pred_region
    _
  $region17: #{tpu_custom_call.1} parent=0 // pred_fallthru
    _
  // Predicated region
  $region18: #{tpu_custom_call.1} parent=0 // pred_check
    _
  $region19: #{tpu_custom_call.1} parent=0 // pred_check_branch
    %143 = sbr.rel (0) target = $region21
  $region20: #{tpu_custom_call.1} parent=0 // pred_region
    _
  $region21: #{tpu_custom_call.1} parent=0 // pred_fallthru
    _

</llo_original>
